<compile_context>
chip_gen: v6e
topology: v6e:2x2x1
jax: 0.10.0
libtpu: 0.0.40
codegen_flags: <defaults>
</compile_context>

<pallas_src>
import jax
import jax.numpy as jnp
from jax.experimental import pallas as pl
from jax.experimental.pallas import tpu as pltpu


def _mean_pool_kernel(h_ref, m_ref, inv_ref, o_ref, acc_ref):
    # h_ref:   (TB, TS, H) hidden-state tile (native dtype, e.g. f32/bf16)
    # m_ref:   (TB, TS)    mask tile, already cast to h's dtype (0/1 values)
    # inv_ref: (TB, 1)     f32, 1 / clamp(sum_s mask, 1e-9)  (per batch row)
    # o_ref:   (TB, H)     f32 output
    # acc_ref: (TB, 1, H)  f32 accumulator, resident across the S grid axis
    s = pl.program_id(1)

    @pl.when(s == 0)
    def _init():
        acc_ref[...] = jnp.zeros_like(acc_ref)

    # MXU contraction over the sequence tile: for every batch row,
    # (1, TS) @ (TS, H) -> (1, H), accumulated in f32.
    m = m_ref[...][:, None, :]  # (TB, 1, TS)
    acc_ref[...] += jnp.einsum(
        "bqs,bsh->bqh",
        m,
        h_ref[...],
        preferred_element_type=jnp.float32,
        precision=jax.lax.Precision.HIGHEST,
    )

    @pl.when(s == pl.num_programs(1) - 1)
    def _finalize():
        o_ref[...] = (acc_ref[:, 0, :] * inv_ref[...]).astype(o_ref.dtype)


def _choose_seq_tile(S, TB, H, itemsize, target_bytes=4 * 1024 * 1024):
    """Largest TS that divides S, is lane-aligned (multiple of 128, needed by
    the (TB, TS) mask block), and keeps a (TB, TS, H) block under
    ~target_bytes. Falls back to TS == S (full sequence) when S has no
    128-multiple divisor (e.g. tiny S)."""
    candidates = [ts for ts in range(128, S + 1, 128) if S % ts == 0]
    if not candidates:
        return S
    fitting = [ts for ts in candidates if TB * ts * H * itemsize <= target_bytes]
    return max(fitting) if fitting else min(candidates)


def mean_pooling(last_hidden_state, attention_mask):
    """Masked mean pooling over the sequence axis.

    last_hidden_state: [B, S, H] float (f32 or bf16)
    attention_mask:    [B, S]    any numeric dtype (0/1 values)
    returns:           [B, H]    float32
    """
    B, S, H = last_hidden_state.shape
    assert attention_mask.shape == (B, S)
    dtype = last_hidden_state.dtype

    # Mask in the hidden dtype so the MXU sees matching operand dtypes
    # (bf16 hidden stays bf16 -- no f32 up-cast of the big tile in the kernel).
    mask = attention_mask.astype(dtype)

    # Precompute the per-row reciprocal denominator outside the kernel
    # (removes casts / clamp / divide from the hot loop).
    sum_mask = jnp.sum(attention_mask.astype(jnp.float32), axis=1, keepdims=True)
    inv_len = 1.0 / jnp.maximum(sum_mask, 1e-9)  # (B, 1) f32

    # Batch tile: 8 rows -> sublane-full mask loads and unmasked output
    # stores; fall back to the full (small) batch in one block otherwise.
    TB = 8 if B % 8 == 0 else B
    # TODO(synk): for large B not divisible by 8, pad B up to a multiple of 8
    # instead of taking TB == B.
    TS = _choose_seq_tile(S, TB, H, jnp.dtype(dtype).itemsize)

    grid = (B // TB, S // TS)

    return pl.pallas_call(
        _mean_pool_kernel,
        out_shape=jax.ShapeDtypeStruct((B, H), jnp.float32),
        grid_spec=pltpu.PrefetchScalarGridSpec(
            num_scalar_prefetch=0,
            grid=grid,
            in_specs=[
                pl.BlockSpec((TB, TS, H), lambda b, s: (b, s, 0)),
                pl.BlockSpec((TB, TS), lambda b, s: (b, s)),
                pl.BlockSpec((TB, 1), lambda b, s: (b, 0)),
            ],
            out_specs=pl.BlockSpec((TB, H), lambda b, s: (b, 0)),
            scratch_shapes=[pltpu.VMEM((TB, 1, H), jnp.float32)],
        ),
        compiler_params=pltpu.CompilerParams(
            # Batch tiles are independent (both v7x TensorCores get work);
            # the sequence axis is the reduction -> last + "arbitrary".
            dimension_semantics=("parallel", "arbitrary"),
        ),
    )(last_hidden_state, mask, inv_len)


def mean_pooling_ref(last_hidden_state, attention_mask):
    """Pure-JAX reference mirroring the PyTorch module."""
    mask = attention_mask[..., None].astype(jnp.float32)
    mask = jnp.broadcast_to(mask, last_hidden_state.shape)
    sum_embeddings = jnp.sum(last_hidden_state.astype(jnp.float32) * mask, axis=1)
    sum_mask = jnp.maximum(jnp.sum(mask, axis=1), 1e-9)
    return sum_embeddings / sum_mask


if __name__ == "__main__":
    key = jax.random.PRNGKey(0)
    k1, _ = jax.random.split(key)

    B, S, H = 2, 8, 32
    last_hidden_state = jax.random.normal(k1, (B, S, H), dtype=jnp.float32)
    # A realistic attention mask: a few padded positions per row (int, like HF).
    lengths = jnp.array([6, 3], dtype=jnp.int32)
    attention_mask = (jnp.arange(S)[None, :] < lengths[:, None]).astype(jnp.int32)

    out = mean_pooling(last_hidden_state, attention_mask)
    out = jax.block_until_ready(out)

    ref = mean_pooling_ref(last_hidden_state, attention_mask)
    assert out.shape == (B, H)
    assert jnp.allclose(out, ref, atol=1e-5, rtol=1e-5), "mismatch vs reference"

    print("KERNEL_OK")
</pallas_src>

<mosaic_0001>
module attributes {stable_mosaic.version = 11 : i64} {
  func.func @_mean_pool_kernel(%arg0: i32, %arg1: i32, %arg2: memref<2x8x32xf32, #tpu.memory_space<vmem>>, %arg3: memref<2x8xf32, #tpu.memory_space<vmem>>, %arg4: memref<2x1xf32, #tpu.memory_space<vmem>>, %arg5: memref<2x32xf32, #tpu.memory_space<vmem>>, %arg6: memref<2x1x32xf32, #tpu.memory_space<vmem>>) attributes {dimension_semantics = [#tpu.dimension_semantics<parallel>, #tpu.dimension_semantics<arbitrary>], iteration_bounds = array<i64: 1, 1>, scalar_prefetch = 0 : i64, scratch_operands = 1 : i64, tpu.core_type = #tpu.core_type<tc>, window_params = [{transform_indices = @transform_0, window_bounds = array<i64: 2, 8, 32>}, {transform_indices = @transform_1, window_bounds = array<i64: 2, 8>}, {transform_indices = @transform_2, window_bounds = array<i64: 2, 1>}, {transform_indices = @transform_3, window_bounds = array<i64: 2, 32>}]} {
    %c0_i32 = arith.constant 0 : i32
    %0 = arith.cmpi eq, %arg1, %c0_i32 : i32
    %1 = arith.extui %0 : i1 to i32
    %c0_i32_0 = arith.constant 0 : i32
    %2 = arith.cmpi ne, %1, %c0_i32_0 : i32
    scf.if %2 {
      %cst_13 = arith.constant 0.000000e+00 : f32
      %13 = vector.broadcast %cst_13 : f32 to vector<2x1x32xf32>
      %c0_14 = arith.constant 0 : index
      %c0_15 = arith.constant 0 : index
      %c0_16 = arith.constant 0 : index
      %14 = vector.load %arg6[%c0_14, %c0_15, %c0_16] : memref<2x1x32xf32, #tpu.memory_space<vmem>>, vector<2x1x32xf32>
      tpu.vector_store %arg6[%c0_14, %c0_15, %c0_16], %13 {strides = array<i32>} : memref<2x1x32xf32, #tpu.memory_space<vmem>>, vector<2x1x32xf32>,
    } else {
    }
    %c0 = arith.constant 0 : index
    %c0_1 = arith.constant 0 : index
    %3 = vector.load %arg3[%c0, %c0_1] : memref<2x8xf32, #tpu.memory_space<vmem>>, vector<2x8xf32>
    %4 = vector.shape_cast %3 : vector<2x8xf32> to vector<2x1x8xf32>
    %c0_2 = arith.constant 0 : index
    %c0_3 = arith.constant 0 : index
    %c0_4 = arith.constant 0 : index
    %5 = vector.load %arg6[%c0_2, %c0_3, %c0_4] : memref<2x1x32xf32, #tpu.memory_space<vmem>>, vector<2x1x32xf32>
    %c0_5 = arith.constant 0 : index
    %c0_6 = arith.constant 0 : index
    %c0_7 = arith.constant 0 : index
    %6 = vector.load %arg2[%c0_5, %c0_6, %c0_7] : memref<2x8x32xf32, #tpu.memory_space<vmem>>, vector<2x8x32xf32>
    "tpu.trace_start"() <{level = 10 : i32, message = "bqs,bsh->bqh"}> : () -> ()
    %cst = arith.constant dense<0.000000e+00> : vector<2x1x32xf32>
    %7 = tpu.matmul %4, %6, %cst {dimension_numbers = #tpu.dot_dimension_numbers<[2], [1], [1], [2], [0, 0, 0, 1, 1, 2], [0], [0]>, precision = #tpu.contract_precision<fp32>} : vector<2x1x8xf32>, vector<2x8x32xf32>, vector<2x1x32xf32> -> vector<2x1x32xf32>
    "tpu.trace_stop"() : () -> ()
    %8 = arith.addf %5, %7 : vector<2x1x32xf32>
    %c0_8 = arith.constant 0 : index
    %c0_9 = arith.constant 0 : index
    %c0_10 = arith.constant 0 : index
    %9 = vector.load %arg6[%c0_8, %c0_9, %c0_10] : memref<2x1x32xf32, #tpu.memory_space<vmem>>, vector<2x1x32xf32>
    tpu.vector_store %arg6[%c0_8, %c0_9, %c0_10], %8 {strides = array<i32>} : memref<2x1x32xf32, #tpu.memory_space<vmem>>, vector<2x1x32xf32>,
    %c0_i32_11 = arith.constant 0 : i32
    %10 = arith.cmpi eq, %arg1, %c0_i32_11 : i32
    %11 = arith.extui %10 : i1 to i32
    %c0_i32_12 = arith.constant 0 : i32
    %12 = arith.cmpi ne, %11, %c0_i32_12 : i32
    scf.if %12 {
      %c0_13 = arith.constant 0 : index
      %c0_14 = arith.constant 0 : index
      %c0_15 = arith.constant 0 : index
      %13 = vector.load %arg6[%c0_13, %c0_14, %c0_15] : memref<2x1x32xf32, #tpu.memory_space<vmem>>, vector<2x1x32xf32>
      %14 = vector.shape_cast %13 : vector<2x1x32xf32> to vector<2x32xf32>
      %c0_16 = arith.constant 0 : index
      %c0_17 = arith.constant 0 : index
      %15 = vector.load %arg4[%c0_16, %c0_17] : memref<2x1xf32, #tpu.memory_space<vmem>>, vector<2x1xf32>
      %16 = vector.broadcast %15 : vector<2x1xf32> to vector<2x32xf32>
      %17 = arith.mulf %14, %16 : vector<2x32xf32>
      %c0_18 = arith.constant 0 : index
      %c0_19 = arith.constant 0 : index
      %18 = vector.load %arg5[%c0_18, %c0_19] : memref<2x32xf32, #tpu.memory_space<vmem>>, vector<2x32xf32>
      tpu.vector_store %arg5[%c0_18, %c0_19], %17 {strides = array<i32>} : memref<2x32xf32, #tpu.memory_space<vmem>>, vector<2x32xf32>,
    } else {
    }
    return
  }
  func.func @transform_0(%arg0: i32, %arg1: i32) -> (i32, i32, i32) {
    %c0_i32 = arith.constant 0 : i32
    %c0_i32_0 = arith.constant 0 : i32
    return %arg0, %arg1, %c0_i32 : i32, i32, i32
  }
  func.func @transform_1(%arg0: i32, %arg1: i32) -> (i32, i32) {
    %c0_i32 = arith.constant 0 : i32
    return %arg0, %arg1 : i32, i32
  }
  func.func @transform_2(%arg0: i32, %arg1: i32) -> (i32, i32) {
    %c0_i32 = arith.constant 0 : i32
    %c0_i32_0 = arith.constant 0 : i32
    return %arg0, %c0_i32 : i32, i32
  }
  func.func @transform_3(%arg0: i32, %arg1: i32) -> (i32, i32) {
    %c0_i32 = arith.constant 0 : i32
    %c0_i32_0 = arith.constant 0 : i32
    return %arg0, %c0_i32 : i32, i32
  }
}

</mosaic_0001>

<llo_original>
// kernel: tpu_custom_call.1
$region0: #{tpu_custom_call.1}
  #allocation0 [shape = 'u32[]', space=smem, size = 0x4, offset = 0x4, fixed_abs, tag = 'smem constant byte address 0x4 - core index']
  #allocation1 [shape = 'u32[144,128]{1,0:T(1,128)}', space=vmem, size = 0x12000, scoped, tag = 'internal scratch']
  #allocation2 [shape = 'f32[2,1,32]{2,1,0:T(1,128)}', space=vmem, size = 0x400, scoped, tag = 'scratch operand']
  %s0 = inlined_call_operand.hbm [shape: f32[2,8,32], index: 0, kind: input, shape index: {}]
  %s1 = inlined_call_operand.vmem [shape: f32[2,8], index: 1, kind: input, shape index: {}]
  %s2 = inlined_call_operand.vmem [shape: f32[2,1], index: 2, kind: input, shape index: {}]
  %s3 = inlined_call_operand.hbm [shape: f32[2,32], index: 3, kind: output, shape index: {}]
  %s4 = sld [smem:[#allocation0]]
  $region34: #{tpu_custom_call.1} parent=0
    _
  %s6 = ssub.s32 1, %s4
  %s7 = scalar_select 0, %s6, %s4
  $region1: #{tpu_custom_call.1} parent=0
    #allocation3 [shape = 'u8[8192]{0}', space=vmem, size = 0x2000, scoped, tag = 'input window, operand 0, single buffered']
    #allocation4 [shape = 's32[1]{0}', space=sflag, size = 0x4, scoped, tag = 'scoped memory for tpu_custom_call.1']
    #allocation5 [shape = 's32[1]{0}', space=sflag, size = 0x4, scoped, tag = 'scoped memory for tpu_custom_call.1']
    #allocation6 [shape = 'u8[1024]{0}', space=vmem, size = 0x400, scoped, tag = 'output window, operand 0, single buffered']
    %8 = vsyncpa [#allocation4], 0
    %9 = vsyncpa [#allocation5], 0
    // Predicated region
    $region2: #{tpu_custom_call.1} parent=1 // pred_check
      _
    $region3: #{tpu_custom_call.1} parent=1 // pred_check_branch
      %11 = sbr.rel (0) target = $region5
    $region4: #{tpu_custom_call.1} parent=1 // pred_region
      %s13 = ssub.s32 256, 256
      %14 = vsyncadd [#allocation4], %s13
      %s15 = sshll.u32 [#allocation3], 4
      %s16 = int_to_ptr.vmem [resolvable:$true] %s15
      %21 = dma.hbm_to_vmem [thread:$0]  %s0, 256, %s16, [#allocation4], 128, 128, 8
    $region5: #{tpu_custom_call.1} parent=1 // pred_fallthru
      _
    // Predicated region
    $region6: #{tpu_custom_call.1} parent=1 // pred_check
      _
    $region7: #{tpu_custom_call.1} parent=1 // pred_check_branch
      %23 = sbr.rel (0) target = $region9
    $region8: #{tpu_custom_call.1} parent=1 // pred_region
      _
    $region9: #{tpu_custom_call.1} parent=1 // pred_fallthru
      _
    // Predicated region
    $region10: #{tpu_custom_call.1} parent=1 // pred_check
      _
    $region11: #{tpu_custom_call.1} parent=1 // pred_check_branch
      %25 = sbr.rel (0) target = $region13
    $region12: #{tpu_custom_call.1} parent=1 // pred_region
      _
    $region13: #{tpu_custom_call.1} parent=1 // pred_fallthru
      _
    // Predicated region
    $region14: #{tpu_custom_call.1} parent=1 // pred_check
      _
    $region15: #{tpu_custom_call.1} parent=1 // pred_check_branch
      %27 = sbr.rel (0) target = $region17
    $region16: #{tpu_custom_call.1} parent=1 // pred_region
      %28 = dma.done [#allocation4], 256
    $region17: #{tpu_custom_call.1} parent=1 // pred_fallthru
      _
    %p29 = scmp.eq.s32.totalorder 0, 0
    // Predicated region
    $region18: #{tpu_custom_call.1} parent=1 // pred_check
      %p30 = pneg %p29
    $region19: #{tpu_custom_call.1} parent=1 // pred_check_branch
      %32 = sbr.rel (%p30) target = $region21
    $region20: #{tpu_custom_call.1} parent=1 // pred_region
      %vm33 = vcmask 253952
      %34 = vst.msk [vmem:[#allocation2] sm:$0x1] %vm33, 0.0
      %35 = vst.msk [vmem:[#allocation2 + $0x1] sm:$0x1] %vm33, 0.0
    $region21: #{tpu_custom_call.1} parent=1 // pred_fallthru
      _
    %v36 = vld [vmem:[%s1] sm:$0x3]
    %v39 = vunpack.c.l.s4 1966171168
    %v40 = vunpack.c.0.s8 %v39
    %v41 = vlaneseq
    %v42 = vshrl.u32 %v41, 7
    %v43 = vsub.s32 %v40, %v42
    %v44 = vrot.slane %v36, %v43
    %v45 = vcombine.high %v44, %v44
    %v47 = vunpack.c.l.s4 1966171168
    %v48 = vunpack.c.0.s8 %v47
    %v49 = vlaneseq
    %v50 = vshrl.u32 %v49, 7
    %v51 = vsub.s32 %v48, %v50
    %v52 = vrot.slane %v44, %v51
    %v54 = vunpack.c.l.s4 1966171168
    %v55 = vunpack.c.0.s8 %v54
    %v56 = vlaneseq
    %v57 = vshrl.u32 %v56, 7
    %v58 = vsub.s32 %v55, %v57
    %v59 = vrot.slane %v45, %v58
    %v60 = vld [vmem:[#allocation2] sm:$0x1]
    %v61 = vld [vmem:[#allocation2 + $0x1] sm:$0x1]
    %v62 = vld [vmem:[#allocation3] sm:$0xff]
    %v63 = vld [vmem:[#allocation3 + $0x8] sm:$0xff]
    %vm64 = vcmask 64512
    %v65 = vsel %vm64, %v52, 0
    %67 = vmatprep.subr.mxu0 0.0
    %68 = vmatpush1.msra.mxu0 0.0
    %69 = vmatprep.subr.mxu0 0.0
    %70 = vmatpush1.msra.mxu0 0.0
    %71 = vmatprep.subr.mxu0 0.0
    %72 = vmatpush1.msra.mxu0 0.0
    %73 = vmatprep.subr.mxu0 0.0
    %74 = vmatpush1.msra.mxu0 0.0
    %75 = vmatprep.subr.mxu0 0.0
    %76 = vmatpush1.msra.mxu0 0.0
    %77 = vmatprep.subr.mxu0 0.0
    %78 = vmatpush1.msra.mxu0 0.0
    %79 = vmatprep.subr.mxu0 0.0
    %80 = vmatpush1.msra.mxu0 0.0
    %81 = vmatprep.subr.mxu0 0.0
    %82 = vmatpush1.msra.mxu0 0.0
    %83 = vmatprep.subr.mxu0 0.0
    %84 = vmatpush1.msra.mxu0 0.0
    %85 = vmatprep.subr.mxu0 0.0
    %86 = vmatpush1.msra.mxu0 0.0
    %87 = vmatprep.subr.mxu0 0.0
    %88 = vmatpush1.msra.mxu0 0.0
    %89 = vmatprep.subr.mxu0 0.0
    %90 = vmatpush1.msra.mxu0 0.0
    %91 = vmatprep.subr.mxu0 0.0
    %92 = vmatpush1.msra.mxu0 0.0
    %93 = vmatprep.subr.mxu0 0.0
    %94 = vmatpush1.msra.mxu0 0.0
    %95 = vmatprep.subr.mxu0 0.0
    %96 = vmatpush1.msra.mxu0 0.0
    %97 = vmatprep.subr.mxu0 0.0
    %v98 = vand.u32 %v62, 4294901760
    %99 = vmatpush1.msra.mxu0 %v98
    %100 = vmatprep.subr.mxu0 0.0
    %101 = vmatpush2.msra.mxu0 0.0
    %102 = vmatprep.subr.mxu0 0.0
    %103 = vmatpush2.msra.mxu0 0.0
    %104 = vmatprep.subr.mxu0 0.0
    %105 = vmatpush2.msra.mxu0 0.0
    %106 = vmatprep.subr.mxu0 0.0
    %107 = vmatpush2.msra.mxu0 0.0
    %108 = vmatprep.subr.mxu0 0.0
    %109 = vmatpush2.msra.mxu0 0.0
    %110 = vmatprep.subr.mxu0 0.0
    %111 = vmatpush2.msra.mxu0 0.0
    %112 = vmatprep.subr.mxu0 0.0
    %113 = vmatpush2.msra.mxu0 0.0
    %114 = vmatprep.subr.mxu0 0.0
    %115 = vmatpush2.msra.mxu0 0.0
    %116 = vmatprep.subr.mxu0 0.0
    %117 = vmatpush2.msra.mxu0 0.0
    %118 = vmatprep.subr.mxu0 0.0
    %119 = vmatpush2.msra.mxu0 0.0
    %120 = vmatprep.subr.mxu0 0.0
    %121 = vmatpush2.msra.mxu0 0.0
    %122 = vmatprep.subr.mxu0 0.0
    %123 = vmatpush2.msra.mxu0 0.0
    %124 = vmatprep.subr.mxu0 0.0
    %125 = vmatpush2.msra.mxu0 0.0
    %126 = vmatprep.subr.mxu0 0.0
    %127 = vmatpush2.msra.mxu0 0.0
    %128 = vmatprep.subr.mxu0 0.0
    %129 = vmatpush2.msra.mxu0 0.0
    %130 = vmatprep.subr.mxu0 0.0
    %131 = vmatpush2.msra.mxu0 0.0
    %132 = vmatprep.mubr.f32.mxu0 0.0
    %v133 = vand.u32 %v65, 4294901760
    %v134 = vsub.f32 %v65, %v133
    %v135 = vand.u32 %v134, 4294901760
    %v136 = vsub.f32 %v134, %v135
    %v137 = vand.u32 %v136, 4294901760
    %138 = vmatmul.mubr.f32.gmra.mxu0 %v137
    %v139 = vpop.f32.mrf.mxu0
    %v140 = vadd.f32 0.0, %v139
    %v141 = vpop.f32.mrf.mxu0
    %142 = vdwg.mxu0
    %143 = vmatprep.subr.mxu0 0.0
    %144 = vmatpush1.msra.mxu0 0.0
    %145 = vmatprep.subr.mxu0 0.0
    %146 = vmatpush1.msra.mxu0 0.0
    %147 = vmatprep.subr.mxu0 0.0
    %148 = vmatpush1.msra.mxu0 0.0
    %149 = vmatprep.subr.mxu0 0.0
    %150 = vmatpush1.msra.mxu0 0.0
    %151 = vmatprep.subr.mxu0 0.0
    %152 = vmatpush1.msra.mxu0 0.0
    %153 = vmatprep.subr.mxu0 0.0
    %154 = vmatpush1.msra.mxu0 0.0
    %155 = vmatprep.subr.mxu0 0.0
    %156 = vmatpush1.msra.mxu0 0.0
    %157 = vmatprep.subr.mxu0 0.0
    %158 = vmatpush1.msra.mxu0 0.0
    %159 = vmatprep.subr.mxu0 0.0
    %160 = vmatpush1.msra.mxu0 0.0
    %161 = vmatprep.subr.mxu0 0.0
    %162 = vmatpush1.msra.mxu0 0.0
    %163 = vmatprep.subr.mxu0 0.0
    %164 = vmatpush1.msra.mxu0 0.0
    %165 = vmatprep.subr.mxu0 0.0
    %166 = vmatpush1.msra.mxu0 0.0
    %167 = vmatprep.subr.mxu0 0.0
    %168 = vmatpush1.msra.mxu0 0.0
    %169 = vmatprep.subr.mxu0 0.0
    %170 = vmatpush1.msra.mxu0 0.0
    %171 = vmatprep.subr.mxu0 0.0
    %172 = vmatpush1.msra.mxu0 0.0
    %173 = vmatprep.subr.mxu0 0.0
    %v174 = vand.u32 %v62, 4294901760
    %v175 = vsub.f32 %v62, %v174
    %v176 = vand.u32 %v175, 4294901760
    %v177 = vsub.f32 %v175, %v176
    %v178 = vand.u32 %v177, 4294901760
    %179 = vmatpush1.msra.mxu0 %v178
    %180 = vmatprep.subr.mxu0 0.0
    %181 = vmatpush2.msra.mxu0 0.0
    %182 = vmatprep.subr.mxu0 0.0
    %183 = vmatpush2.msra.mxu0 0.0
    %184 = vmatprep.subr.mxu0 0.0
    %185 = vmatpush2.msra.mxu0 0.0
    %186 = vmatprep.subr.mxu0 0.0
    %187 = vmatpush2.msra.mxu0 0.0
    %188 = vmatprep.subr.mxu0 0.0
    %189 = vmatpush2.msra.mxu0 0.0
    %190 = vmatprep.subr.mxu0 0.0
    %191 = vmatpush2.msra.mxu0 0.0
    %192 = vmatprep.subr.mxu0 0.0
    %193 = vmatpush2.msra.mxu0 0.0
    %194 = vmatprep.subr.mxu0 0.0
    %195 = vmatpush2.msra.mxu0 0.0
    %196 = vmatprep.subr.mxu0 0.0
    %197 = vmatpush2.msra.mxu0 0.0
    %198 = vmatprep.subr.mxu0 0.0
    %199 = vmatpush2.msra.mxu0 0.0
    %200 = vmatprep.subr.mxu0 0.0
    %201 = vmatpush2.msra.mxu0 0.0
    %202 = vmatprep.subr.mxu0 0.0
    %203 = vmatpush2.msra.mxu0 0.0
    %204 = vmatprep.subr.mxu0 0.0
    %205 = vmatpush2.msra.mxu0 0.0
    %206 = vmatprep.subr.mxu0 0.0
    %207 = vmatpush2.msra.mxu0 0.0
    %208 = vmatprep.subr.mxu0 0.0
    %209 = vmatpush2.msra.mxu0 0.0
    %210 = vmatprep.subr.mxu0 0.0
    %211 = vmatpush2.msra.mxu0 0.0
    %212 = vmatprep.mubr.f32.mxu0 0.0
    %v213 = vand.u32 %v65, 4294901760
    %214 = vmatmul.mubr.f32.gmra.mxu0 %v213
    %v215 = vpop.f32.mrf.mxu0
    %v216 = vadd.f32 %v140, %v215
    %v217 = vpop.f32.mrf.mxu0
    %218 = vdwg.mxu0
    %219 = vmatprep.subr.mxu0 0.0
    %220 = vmatpush1.msra.mxu0 0.0
    %221 = vmatprep.subr.mxu0 0.0
    %222 = vmatpush1.msra.mxu0 0.0
    %223 = vmatprep.subr.mxu0 0.0
    %224 = vmatpush1.msra.mxu0 0.0
    %225 = vmatprep.subr.mxu0 0.0
    %226 = vmatpush1.msra.mxu0 0.0
    %227 = vmatprep.subr.mxu0 0.0
    %228 = vmatpush1.msra.mxu0 0.0
    %229 = vmatprep.subr.mxu0 0.0
    %230 = vmatpush1.msra.mxu0 0.0
    %231 = vmatprep.subr.mxu0 0.0
    %232 = vmatpush1.msra.mxu0 0.0
    %233 = vmatprep.subr.mxu0 0.0
    %234 = vmatpush1.msra.mxu0 0.0
    %235 = vmatprep.subr.mxu0 0.0
    %236 = vmatpush1.msra.mxu0 0.0
    %237 = vmatprep.subr.mxu0 0.0
    %238 = vmatpush1.msra.mxu0 0.0
    %239 = vmatprep.subr.mxu0 0.0
    %240 = vmatpush1.msra.mxu0 0.0
    %241 = vmatprep.subr.mxu0 0.0
    %242 = vmatpush1.msra.mxu0 0.0
    %243 = vmatprep.subr.mxu0 0.0
    %244 = vmatpush1.msra.mxu0 0.0
    %245 = vmatprep.subr.mxu0 0.0
    %246 = vmatpush1.msra.mxu0 0.0
    %247 = vmatprep.subr.mxu0 0.0
    %248 = vmatpush1.msra.mxu0 0.0
    %249 = vmatprep.subr.mxu0 0.0
    %v250 = vand.u32 %v62, 4294901760
    %v251 = vsub.f32 %v62, %v250
    %252 = vmatpush1.msra.mxu0 %v251
    %253 = vmatprep.subr.mxu0 0.0
    %254 = vmatpush2.msra.mxu0 0.0
    %255 = vmatprep.subr.mxu0 0.0
    %256 = vmatpush2.msra.mxu0 0.0
    %257 = vmatprep.subr.mxu0 0.0
    %258 = vmatpush2.msra.mxu0 0.0
    %259 = vmatprep.subr.mxu0 0.0
    %260 = vmatpush2.msra.mxu0 0.0
    %261 = vmatprep.subr.mxu0 0.0
    %262 = vmatpush2.msra.mxu0 0.0
    %263 = vmatprep.subr.mxu0 0.0
    %264 = vmatpush2.msra.mxu0 0.0
    %265 = vmatprep.subr.mxu0 0.0
    %266 = vmatpush2.msra.mxu0 0.0
    %267 = vmatprep.subr.mxu0 0.0
    %268 = vmatpush2.msra.mxu0 0.0
    %269 = vmatprep.subr.mxu0 0.0
    %270 = vmatpush2.msra.mxu0 0.0
    %271 = vmatprep.subr.mxu0 0.0
    %272 = vmatpush2.msra.mxu0 0.0
    %273 = vmatprep.subr.mxu0 0.0
    %274 = vmatpush2.msra.mxu0 0.0
    %275 = vmatprep.subr.mxu0 0.0
    %276 = vmatpush2.msra.mxu0 0.0
    %277 = vmatprep.subr.mxu0 0.0
    %278 = vmatpush2.msra.mxu0 0.0
    %279 = vmatprep.subr.mxu0 0.0
    %280 = vmatpush2.msra.mxu0 0.0
    %281 = vmatprep.subr.mxu0 0.0
    %282 = vmatpush2.msra.mxu0 0.0
    %283 = vmatprep.subr.mxu0 0.0
    %284 = vmatpush2.msra.mxu0 0.0
    %285 = vmatprep.mubr.f32.mxu0 0.0
    %v286 = vand.u32 %v65, 4294901760
    %v287 = vsub.f32 %v65, %v286
    %288 = vmatmul.mubr.f32.gmra.mxu0 %v287
    %v289 = vpop.f32.mrf.mxu0
    %v290 = vadd.f32 %v216, %v289
    %v291 = vpop.f32.mrf.mxu0
    %292 = vdwg.mxu0
    %293 = vmatprep.subr.mxu0 0.0
    %294 = vmatpush1.msra.mxu0 0.0
    %295 = vmatprep.subr.mxu0 0.0
    %296 = vmatpush1.msra.mxu0 0.0
    %297 = vmatprep.subr.mxu0 0.0
    %298 = vmatpush1.msra.mxu0 0.0
    %299 = vmatprep.subr.mxu0 0.0
    %300 = vmatpush1.msra.mxu0 0.0
    %301 = vmatprep.subr.mxu0 0.0
    %302 = vmatpush1.msra.mxu0 0.0
    %303 = vmatprep.subr.mxu0 0.0
    %304 = vmatpush1.msra.mxu0 0.0
    %305 = vmatprep.subr.mxu0 0.0
    %306 = vmatpush1.msra.mxu0 0.0
    %307 = vmatprep.subr.mxu0 0.0
    %308 = vmatpush1.msra.mxu0 0.0
    %309 = vmatprep.subr.mxu0 0.0
    %310 = vmatpush1.msra.mxu0 0.0
    %311 = vmatprep.subr.mxu0 0.0
    %312 = vmatpush1.msra.mxu0 0.0
    %313 = vmatprep.subr.mxu0 0.0
    %314 = vmatpush1.msra.mxu0 0.0
    %315 = vmatprep.subr.mxu0 0.0
    %316 = vmatpush1.msra.mxu0 0.0
    %317 = vmatprep.subr.mxu0 0.0
    %318 = vmatpush1.msra.mxu0 0.0
    %319 = vmatprep.subr.mxu0 0.0
    %320 = vmatpush1.msra.mxu0 0.0
    %321 = vmatprep.subr.mxu0 0.0
    %322 = vmatpush1.msra.mxu0 0.0
    %323 = vmatprep.subr.mxu0 0.0
    %v324 = vand.u32 %v62, 4294901760
    %325 = vmatpush1.msra.mxu0 %v324
    %326 = vmatprep.subr.mxu0 0.0
    %327 = vmatpush2.msra.mxu0 0.0
    %328 = vmatprep.subr.mxu0 0.0
    %329 = vmatpush2.msra.mxu0 0.0
    %330 = vmatprep.subr.mxu0 0.0
    %331 = vmatpush2.msra.mxu0 0.0
    %332 = vmatprep.subr.mxu0 0.0
    %333 = vmatpush2.msra.mxu0 0.0
    %334 = vmatprep.subr.mxu0 0.0
    %335 = vmatpush2.msra.mxu0 0.0
    %336 = vmatprep.subr.mxu0 0.0
    %337 = vmatpush2.msra.mxu0 0.0
    %338 = vmatprep.subr.mxu0 0.0
    %339 = vmatpush2.msra.mxu0 0.0
    %340 = vmatprep.subr.mxu0 0.0
    %341 = vmatpush2.msra.mxu0 0.0
    %342 = vmatprep.subr.mxu0 0.0
    %343 = vmatpush2.msra.mxu0 0.0
    %344 = vmatprep.subr.mxu0 0.0
    %345 = vmatpush2.msra.mxu0 0.0
    %346 = vmatprep.subr.mxu0 0.0
    %347 = vmatpush2.msra.mxu0 0.0
    %348 = vmatprep.subr.mxu0 0.0
    %349 = vmatpush2.msra.mxu0 0.0
    %350 = vmatprep.subr.mxu0 0.0
    %351 = vmatpush2.msra.mxu0 0.0
    %352 = vmatprep.subr.mxu0 0.0
    %353 = vmatpush2.msra.mxu0 0.0
    %354 = vmatprep.subr.mxu0 0.0
    %355 = vmatpush2.msra.mxu0 0.0
    %356 = vmatprep.subr.mxu0 0.0
    %357 = vmatpush2.msra.mxu0 0.0
    %358 = vmatprep.mubr.f32.mxu0 0.0
    %v359 = vand.u32 %v65, 4294901760
    %v360 = vsub.f32 %v65, %v359
    %v361 = vand.u32 %v360, 4294901760
    %362 = vmatmul.mubr.f32.gmra.mxu0 %v361
    %v363 = vpop.f32.mrf.mxu0
    %v364 = vadd.f32 %v290, %v363
    %v365 = vpop.f32.mrf.mxu0
    %366 = vdwg.mxu0
    %367 = vmatprep.subr.mxu0 0.0
    %368 = vmatpush1.msra.mxu0 0.0
    %369 = vmatprep.subr.mxu0 0.0
    %370 = vmatpush1.msra.mxu0 0.0
    %371 = vmatprep.subr.mxu0 0.0
    %372 = vmatpush1.msra.mxu0 0.0
    %373 = vmatprep.subr.mxu0 0.0
    %374 = vmatpush1.msra.mxu0 0.0
    %375 = vmatprep.subr.mxu0 0.0
    %376 = vmatpush1.msra.mxu0 0.0
    %377 = vmatprep.subr.mxu0 0.0
    %378 = vmatpush1.msra.mxu0 0.0
    %379 = vmatprep.subr.mxu0 0.0
    %380 = vmatpush1.msra.mxu0 0.0
    %381 = vmatprep.subr.mxu0 0.0
    %382 = vmatpush1.msra.mxu0 0.0
    %383 = vmatprep.subr.mxu0 0.0
    %384 = vmatpush1.msra.mxu0 0.0
    %385 = vmatprep.subr.mxu0 0.0
    %386 = vmatpush1.msra.mxu0 0.0
    %387 = vmatprep.subr.mxu0 0.0
    %388 = vmatpush1.msra.mxu0 0.0
    %389 = vmatprep.subr.mxu0 0.0
    %390 = vmatpush1.msra.mxu0 0.0
    %391 = vmatprep.subr.mxu0 0.0
    %392 = vmatpush1.msra.mxu0 0.0
    %393 = vmatprep.subr.mxu0 0.0
    %394 = vmatpush1.msra.mxu0 0.0
    %395 = vmatprep.subr.mxu0 0.0
    %396 = vmatpush1.msra.mxu0 0.0
    %397 = vmatprep.subr.mxu0 0.0
    %v398 = vand.u32 %v62, 4294901760
    %v399 = vsub.f32 %v62, %v398
    %v400 = vand.u32 %v399, 4294901760
    %401 = vmatpush1.msra.mxu0 %v400
    %402 = vmatprep.subr.mxu0 0.0
    %403 = vmatpush2.msra.mxu0 0.0
    %404 = vmatprep.subr.mxu0 0.0
    %405 = vmatpush2.msra.mxu0 0.0
    %406 = vmatprep.subr.mxu0 0.0
    %407 = vmatpush2.msra.mxu0 0.0
    %408 = vmatprep.subr.mxu0 0.0
    %409 = vmatpush2.msra.mxu0 0.0
    %410 = vmatprep.subr.mxu0 0.0
    %411 = vmatpush2.msra.mxu0 0.0
    %412 = vmatprep.subr.mxu0 0.0
    %413 = vmatpush2.msra.mxu0 0.0
    %414 = vmatprep.subr.mxu0 0.0
    %415 = vmatpush2.msra.mxu0 0.0
    %416 = vmatprep.subr.mxu0 0.0
    %417 = vmatpush2.msra.mxu0 0.0
    %418 = vmatprep.subr.mxu0 0.0
    %419 = vmatpush2.msra.mxu0 0.0
    %420 = vmatprep.subr.mxu0 0.0
    %421 = vmatpush2.msra.mxu0 0.0
    %422 = vmatprep.subr.mxu0 0.0
    %423 = vmatpush2.msra.mxu0 0.0
    %424 = vmatprep.subr.mxu0 0.0
    %425 = vmatpush2.msra.mxu0 0.0
    %426 = vmatprep.subr.mxu0 0.0
    %427 = vmatpush2.msra.mxu0 0.0
    %428 = vmatprep.subr.mxu0 0.0
    %429 = vmatpush2.msra.mxu0 0.0
    %430 = vmatprep.subr.mxu0 0.0
    %431 = vmatpush2.msra.mxu0 0.0
    %432 = vmatprep.subr.mxu0 0.0
    %433 = vmatpush2.msra.mxu0 0.0
    %434 = vmatprep.mubr.f32.mxu0 0.0
    %v435 = vand.u32 %v65, 4294901760
    %436 = vmatmul.mubr.f32.gmra.mxu0 %v435
    %v437 = vpop.f32.mrf.mxu0
    %v438 = vadd.f32 %v364, %v437
    %v439 = vpop.f32.mrf.mxu0
    %440 = vdwg.mxu0
    %441 = vmatprep.subr.mxu0 0.0
    %442 = vmatpush1.msra.mxu0 0.0
    %443 = vmatprep.subr.mxu0 0.0
    %444 = vmatpush1.msra.mxu0 0.0
    %445 = vmatprep.subr.mxu0 0.0
    %446 = vmatpush1.msra.mxu0 0.0
    %447 = vmatprep.subr.mxu0 0.0
    %448 = vmatpush1.msra.mxu0 0.0
    %449 = vmatprep.subr.mxu0 0.0
    %450 = vmatpush1.msra.mxu0 0.0
    %451 = vmatprep.subr.mxu0 0.0
    %452 = vmatpush1.msra.mxu0 0.0
    %453 = vmatprep.subr.mxu0 0.0
    %454 = vmatpush1.msra.mxu0 0.0
    %455 = vmatprep.subr.mxu0 0.0
    %456 = vmatpush1.msra.mxu0 0.0
    %457 = vmatprep.subr.mxu0 0.0
    %458 = vmatpush1.msra.mxu0 0.0
    %459 = vmatprep.subr.mxu0 0.0
    %460 = vmatpush1.msra.mxu0 0.0
    %461 = vmatprep.subr.mxu0 0.0
    %462 = vmatpush1.msra.mxu0 0.0
    %463 = vmatprep.subr.mxu0 0.0
    %464 = vmatpush1.msra.mxu0 0.0
    %465 = vmatprep.subr.mxu0 0.0
    %466 = vmatpush1.msra.mxu0 0.0
    %467 = vmatprep.subr.mxu0 0.0
    %468 = vmatpush1.msra.mxu0 0.0
    %469 = vmatprep.subr.mxu0 0.0
    %470 = vmatpush1.msra.mxu0 0.0
    %471 = vmatprep.subr.mxu0 0.0
    %v472 = vand.u32 %v62, 4294901760
    %473 = vmatpush1.msra.mxu0 %v472
    %474 = vmatprep.subr.mxu0 0.0
    %475 = vmatpush2.msra.mxu0 0.0
    %476 = vmatprep.subr.mxu0 0.0
    %477 = vmatpush2.msra.mxu0 0.0
    %478 = vmatprep.subr.mxu0 0.0
    %479 = vmatpush2.msra.mxu0 0.0
    %480 = vmatprep.subr.mxu0 0.0
    %481 = vmatpush2.msra.mxu0 0.0
    %482 = vmatprep.subr.mxu0 0.0
    %483 = vmatpush2.msra.mxu0 0.0
    %484 = vmatprep.subr.mxu0 0.0
    %485 = vmatpush2.msra.mxu0 0.0
    %486 = vmatprep.subr.mxu0 0.0
    %487 = vmatpush2.msra.mxu0 0.0
    %488 = vmatprep.subr.mxu0 0.0
    %489 = vmatpush2.msra.mxu0 0.0
    %490 = vmatprep.subr.mxu0 0.0
    %491 = vmatpush2.msra.mxu0 0.0
    %492 = vmatprep.subr.mxu0 0.0
    %493 = vmatpush2.msra.mxu0 0.0
    %494 = vmatprep.subr.mxu0 0.0
    %495 = vmatpush2.msra.mxu0 0.0
    %496 = vmatprep.subr.mxu0 0.0
    %497 = vmatpush2.msra.mxu0 0.0
    %498 = vmatprep.subr.mxu0 0.0
    %499 = vmatpush2.msra.mxu0 0.0
    %500 = vmatprep.subr.mxu0 0.0
    %501 = vmatpush2.msra.mxu0 0.0
    %502 = vmatprep.subr.mxu0 0.0
    %503 = vmatpush2.msra.mxu0 0.0
    %504 = vmatprep.subr.mxu0 0.0
    %505 = vmatpush2.msra.mxu0 0.0
    %506 = vmatprep.mubr.f32.mxu0 0.0
    %v507 = vand.u32 %v65, 4294901760
    %508 = vmatmul.mubr.f32.gmra.mxu0 %v507
    %v509 = vpop.f32.mrf.mxu0
    %v510 = vadd.f32 %v438, %v509
    %v511 = vpop.f32.mrf.mxu0
    %512 = vdwg.mxu0
    %v513 = vsel %vm64, %v59, 0
    %515 = vmatprep.subr.mxu0 0.0
    %516 = vmatpush1.msra.mxu0 0.0
    %517 = vmatprep.subr.mxu0 0.0
    %518 = vmatpush1.msra.mxu0 0.0
    %519 = vmatprep.subr.mxu0 0.0
    %520 = vmatpush1.msra.mxu0 0.0
    %521 = vmatprep.subr.mxu0 0.0
    %522 = vmatpush1.msra.mxu0 0.0
    %523 = vmatprep.subr.mxu0 0.0
    %524 = vmatpush1.msra.mxu0 0.0
    %525 = vmatprep.subr.mxu0 0.0
    %526 = vmatpush1.msra.mxu0 0.0
    %527 = vmatprep.subr.mxu0 0.0
    %528 = vmatpush1.msra.mxu0 0.0
    %529 = vmatprep.subr.mxu0 0.0
    %530 = vmatpush1.msra.mxu0 0.0
    %531 = vmatprep.subr.mxu0 0.0
    %532 = vmatpush1.msra.mxu0 0.0
    %533 = vmatprep.subr.mxu0 0.0
    %534 = vmatpush1.msra.mxu0 0.0
    %535 = vmatprep.subr.mxu0 0.0
    %536 = vmatpush1.msra.mxu0 0.0
    %537 = vmatprep.subr.mxu0 0.0
    %538 = vmatpush1.msra.mxu0 0.0
    %539 = vmatprep.subr.mxu0 0.0
    %540 = vmatpush1.msra.mxu0 0.0
    %541 = vmatprep.subr.mxu0 0.0
    %542 = vmatpush1.msra.mxu0 0.0
    %543 = vmatprep.subr.mxu0 0.0
    %544 = vmatpush1.msra.mxu0 0.0
    %545 = vmatprep.subr.mxu0 0.0
    %v546 = vand.u32 %v63, 4294901760
    %547 = vmatpush1.msra.mxu0 %v546
    %548 = vmatprep.subr.mxu0 0.0
    %549 = vmatpush2.msra.mxu0 0.0
    %550 = vmatprep.subr.mxu0 0.0
    %551 = vmatpush2.msra.mxu0 0.0
    %552 = vmatprep.subr.mxu0 0.0
    %553 = vmatpush2.msra.mxu0 0.0
    %554 = vmatprep.subr.mxu0 0.0
    %555 = vmatpush2.msra.mxu0 0.0
    %556 = vmatprep.subr.mxu0 0.0
    %557 = vmatpush2.msra.mxu0 0.0
    %558 = vmatprep.subr.mxu0 0.0
    %559 = vmatpush2.msra.mxu0 0.0
    %560 = vmatprep.subr.mxu0 0.0
    %561 = vmatpush2.msra.mxu0 0.0
    %562 = vmatprep.subr.mxu0 0.0
    %563 = vmatpush2.msra.mxu0 0.0
    %564 = vmatprep.subr.mxu0 0.0
    %565 = vmatpush2.msra.mxu0 0.0
    %566 = vmatprep.subr.mxu0 0.0
    %567 = vmatpush2.msra.mxu0 0.0
    %568 = vmatprep.subr.mxu0 0.0
    %569 = vmatpush2.msra.mxu0 0.0
    %570 = vmatprep.subr.mxu0 0.0
    %571 = vmatpush2.msra.mxu0 0.0
    %572 = vmatprep.subr.mxu0 0.0
    %573 = vmatpush2.msra.mxu0 0.0
    %574 = vmatprep.subr.mxu0 0.0
    %575 = vmatpush2.msra.mxu0 0.0
    %576 = vmatprep.subr.mxu0 0.0
    %577 = vmatpush2.msra.mxu0 0.0
    %578 = vmatprep.subr.mxu0 0.0
    %579 = vmatpush2.msra.mxu0 0.0
    %580 = vmatprep.mubr.f32.mxu0 0.0
    %v581 = vand.u32 %v513, 4294901760
    %v582 = vsub.f32 %v513, %v581
    %v583 = vand.u32 %v582, 4294901760
    %v584 = vsub.f32 %v582, %v583
    %v585 = vand.u32 %v584, 4294901760
    %586 = vmatmul.mubr.f32.gmra.mxu0 %v585
    %v587 = vpop.f32.mrf.mxu0
    %v588 = vadd.f32 0.0, %v587
    %v589 = vpop.f32.mrf.mxu0
    %590 = vdwg.mxu0
    %591 = vmatprep.subr.mxu0 0.0
    %592 = vmatpush1.msra.mxu0 0.0
    %593 = vmatprep.subr.mxu0 0.0
    %594 = vmatpush1.msra.mxu0 0.0
    %595 = vmatprep.subr.mxu0 0.0
    %596 = vmatpush1.msra.mxu0 0.0
    %597 = vmatprep.subr.mxu0 0.0
    %598 = vmatpush1.msra.mxu0 0.0
    %599 = vmatprep.subr.mxu0 0.0
    %600 = vmatpush1.msra.mxu0 0.0
    %601 = vmatprep.subr.mxu0 0.0
    %602 = vmatpush1.msra.mxu0 0.0
    %603 = vmatprep.subr.mxu0 0.0
    %604 = vmatpush1.msra.mxu0 0.0
    %605 = vmatprep.subr.mxu0 0.0
    %606 = vmatpush1.msra.mxu0 0.0
    %607 = vmatprep.subr.mxu0 0.0
    %608 = vmatpush1.msra.mxu0 0.0
    %609 = vmatprep.subr.mxu0 0.0
    %610 = vmatpush1.msra.mxu0 0.0
    %611 = vmatprep.subr.mxu0 0.0
    %612 = vmatpush1.msra.mxu0 0.0
    %613 = vmatprep.subr.mxu0 0.0
    %614 = vmatpush1.msra.mxu0 0.0
    %615 = vmatprep.subr.mxu0 0.0
    %616 = vmatpush1.msra.mxu0 0.0
    %617 = vmatprep.subr.mxu0 0.0
    %618 = vmatpush1.msra.mxu0 0.0
    %619 = vmatprep.subr.mxu0 0.0
    %620 = vmatpush1.msra.mxu0 0.0
    %621 = vmatprep.subr.mxu0 0.0
    %v622 = vand.u32 %v63, 4294901760
    %v623 = vsub.f32 %v63, %v622
    %v624 = vand.u32 %v623, 4294901760
    %v625 = vsub.f32 %v623, %v624
    %v626 = vand.u32 %v625, 4294901760
    %627 = vmatpush1.msra.mxu0 %v626
    %628 = vmatprep.subr.mxu0 0.0
    %629 = vmatpush2.msra.mxu0 0.0
    %630 = vmatprep.subr.mxu0 0.0
    %631 = vmatpush2.msra.mxu0 0.0
    %632 = vmatprep.subr.mxu0 0.0
    %633 = vmatpush2.msra.mxu0 0.0
    %634 = vmatprep.subr.mxu0 0.0
    %635 = vmatpush2.msra.mxu0 0.0
    %636 = vmatprep.subr.mxu0 0.0
    %637 = vmatpush2.msra.mxu0 0.0
    %638 = vmatprep.subr.mxu0 0.0
    %639 = vmatpush2.msra.mxu0 0.0
    %640 = vmatprep.subr.mxu0 0.0
    %641 = vmatpush2.msra.mxu0 0.0
    %642 = vmatprep.subr.mxu0 0.0
    %643 = vmatpush2.msra.mxu0 0.0
    %644 = vmatprep.subr.mxu0 0.0
    %645 = vmatpush2.msra.mxu0 0.0
    %646 = vmatprep.subr.mxu0 0.0
    %647 = vmatpush2.msra.mxu0 0.0
    %648 = vmatprep.subr.mxu0 0.0
    %649 = vmatpush2.msra.mxu0 0.0
    %650 = vmatprep.subr.mxu0 0.0
    %651 = vmatpush2.msra.mxu0 0.0
    %652 = vmatprep.subr.mxu0 0.0
    %653 = vmatpush2.msra.mxu0 0.0
    %654 = vmatprep.subr.mxu0 0.0
    %655 = vmatpush2.msra.mxu0 0.0
    %656 = vmatprep.subr.mxu0 0.0
    %657 = vmatpush2.msra.mxu0 0.0
    %658 = vmatprep.subr.mxu0 0.0
    %659 = vmatpush2.msra.mxu0 0.0
    %660 = vmatprep.mubr.f32.mxu0 0.0
    %v661 = vand.u32 %v513, 4294901760
    %662 = vmatmul.mubr.f32.gmra.mxu0 %v661
    %v663 = vpop.f32.mrf.mxu0
    %v664 = vadd.f32 %v588, %v663
    %v665 = vpop.f32.mrf.mxu0
    %666 = vdwg.mxu0
    %667 = vmatprep.subr.mxu0 0.0
    %668 = vmatpush1.msra.mxu0 0.0
    %669 = vmatprep.subr.mxu0 0.0
    %670 = vmatpush1.msra.mxu0 0.0
    %671 = vmatprep.subr.mxu0 0.0
    %672 = vmatpush1.msra.mxu0 0.0
    %673 = vmatprep.subr.mxu0 0.0
    %674 = vmatpush1.msra.mxu0 0.0
    %675 = vmatprep.subr.mxu0 0.0
    %676 = vmatpush1.msra.mxu0 0.0
    %677 = vmatprep.subr.mxu0 0.0
    %678 = vmatpush1.msra.mxu0 0.0
    %679 = vmatprep.subr.mxu0 0.0
    %680 = vmatpush1.msra.mxu0 0.0
    %681 = vmatprep.subr.mxu0 0.0
    %682 = vmatpush1.msra.mxu0 0.0
    %683 = vmatprep.subr.mxu0 0.0
    %684 = vmatpush1.msra.mxu0 0.0
    %685 = vmatprep.subr.mxu0 0.0
    %686 = vmatpush1.msra.mxu0 0.0
    %687 = vmatprep.subr.mxu0 0.0
    %688 = vmatpush1.msra.mxu0 0.0
    %689 = vmatprep.subr.mxu0 0.0
    %690 = vmatpush1.msra.mxu0 0.0
    %691 = vmatprep.subr.mxu0 0.0
    %692 = vmatpush1.msra.mxu0 0.0
    %693 = vmatprep.subr.mxu0 0.0
    %694 = vmatpush1.msra.mxu0 0.0
    %695 = vmatprep.subr.mxu0 0.0
    %696 = vmatpush1.msra.mxu0 0.0
    %697 = vmatprep.subr.mxu0 0.0
    %v698 = vand.u32 %v63, 4294901760
    %v699 = vsub.f32 %v63, %v698
    %700 = vmatpush1.msra.mxu0 %v699
    %701 = vmatprep.subr.mxu0 0.0
    %702 = vmatpush2.msra.mxu0 0.0
    %703 = vmatprep.subr.mxu0 0.0
    %704 = vmatpush2.msra.mxu0 0.0
    %705 = vmatprep.subr.mxu0 0.0
    %706 = vmatpush2.msra.mxu0 0.0
    %707 = vmatprep.subr.mxu0 0.0
    %708 = vmatpush2.msra.mxu0 0.0
    %709 = vmatprep.subr.mxu0 0.0
    %710 = vmatpush2.msra.mxu0 0.0
    %711 = vmatprep.subr.mxu0 0.0
    %712 = vmatpush2.msra.mxu0 0.0
    %713 = vmatprep.subr.mxu0 0.0
    %714 = vmatpush2.msra.mxu0 0.0
    %715 = vmatprep.subr.mxu0 0.0
    %716 = vmatpush2.msra.mxu0 0.0
    %717 = vmatprep.subr.mxu0 0.0
    %718 = vmatpush2.msra.mxu0 0.0
    %719 = vmatprep.subr.mxu0 0.0
    %720 = vmatpush2.msra.mxu0 0.0
    %721 = vmatprep.subr.mxu0 0.0
    %722 = vmatpush2.msra.mxu0 0.0
    %723 = vmatprep.subr.mxu0 0.0
    %724 = vmatpush2.msra.mxu0 0.0
    %725 = vmatprep.subr.mxu0 0.0
    %726 = vmatpush2.msra.mxu0 0.0
    %727 = vmatprep.subr.mxu0 0.0
    %728 = vmatpush2.msra.mxu0 0.0
    %729 = vmatprep.subr.mxu0 0.0
    %730 = vmatpush2.msra.mxu0 0.0
    %731 = vmatprep.subr.mxu0 0.0
    %732 = vmatpush2.msra.mxu0 0.0
    %733 = vmatprep.mubr.f32.mxu0 0.0
    %v734 = vand.u32 %v513, 4294901760
    %v735 = vsub.f32 %v513, %v734
    %736 = vmatmul.mubr.f32.gmra.mxu0 %v735
    %v737 = vpop.f32.mrf.mxu0
    %v738 = vadd.f32 %v664, %v737
    %v739 = vpop.f32.mrf.mxu0
    %740 = vdwg.mxu0
    %741 = vmatprep.subr.mxu0 0.0
    %742 = vmatpush1.msra.mxu0 0.0
    %743 = vmatprep.subr.mxu0 0.0
    %744 = vmatpush1.msra.mxu0 0.0
    %745 = vmatprep.subr.mxu0 0.0
    %746 = vmatpush1.msra.mxu0 0.0
    %747 = vmatprep.subr.mxu0 0.0
    %748 = vmatpush1.msra.mxu0 0.0
    %749 = vmatprep.subr.mxu0 0.0
    %750 = vmatpush1.msra.mxu0 0.0
    %751 = vmatprep.subr.mxu0 0.0
    %752 = vmatpush1.msra.mxu0 0.0
    %753 = vmatprep.subr.mxu0 0.0
    %754 = vmatpush1.msra.mxu0 0.0
    %755 = vmatprep.subr.mxu0 0.0
    %756 = vmatpush1.msra.mxu0 0.0
    %757 = vmatprep.subr.mxu0 0.0
    %758 = vmatpush1.msra.mxu0 0.0
    %759 = vmatprep.subr.mxu0 0.0
    %760 = vmatpush1.msra.mxu0 0.0
    %761 = vmatprep.subr.mxu0 0.0
    %762 = vmatpush1.msra.mxu0 0.0
    %763 = vmatprep.subr.mxu0 0.0
    %764 = vmatpush1.msra.mxu0 0.0
    %765 = vmatprep.subr.mxu0 0.0
    %766 = vmatpush1.msra.mxu0 0.0
    %767 = vmatprep.subr.mxu0 0.0
    %768 = vmatpush1.msra.mxu0 0.0
    %769 = vmatprep.subr.mxu0 0.0
    %770 = vmatpush1.msra.mxu0 0.0
    %771 = vmatprep.subr.mxu0 0.0
    %v772 = vand.u32 %v63, 4294901760
    %773 = vmatpush1.msra.mxu0 %v772
    %774 = vmatprep.subr.mxu0 0.0
    %775 = vmatpush2.msra.mxu0 0.0
    %776 = vmatprep.subr.mxu0 0.0
    %777 = vmatpush2.msra.mxu0 0.0
    %778 = vmatprep.subr.mxu0 0.0
    %779 = vmatpush2.msra.mxu0 0.0
    %780 = vmatprep.subr.mxu0 0.0
    %781 = vmatpush2.msra.mxu0 0.0
    %782 = vmatprep.subr.mxu0 0.0
    %783 = vmatpush2.msra.mxu0 0.0
    %784 = vmatprep.subr.mxu0 0.0
    %785 = vmatpush2.msra.mxu0 0.0
    %786 = vmatprep.subr.mxu0 0.0
    %787 = vmatpush2.msra.mxu0 0.0
    %788 = vmatprep.subr.mxu0 0.0
    %789 = vmatpush2.msra.mxu0 0.0
    %790 = vmatprep.subr.mxu0 0.0
    %791 = vmatpush2.msra.mxu0 0.0
    %792 = vmatprep.subr.mxu0 0.0
    %793 = vmatpush2.msra.mxu0 0.0
    %794 = vmatprep.subr.mxu0 0.0
    %795 = vmatpush2.msra.mxu0 0.0
    %796 = vmatprep.subr.mxu0 0.0
    %797 = vmatpush2.msra.mxu0 0.0
    %798 = vmatprep.subr.mxu0 0.0
    %799 = vmatpush2.msra.mxu0 0.0
    %800 = vmatprep.subr.mxu0 0.0
    %801 = vmatpush2.msra.mxu0 0.0
    %802 = vmatprep.subr.mxu0 0.0
    %803 = vmatpush2.msra.mxu0 0.0
    %804 = vmatprep.subr.mxu0 0.0
    %805 = vmatpush2.msra.mxu0 0.0
    %806 = vmatprep.mubr.f32.mxu0 0.0
    %v807 = vand.u32 %v513, 4294901760
    %v808 = vsub.f32 %v513, %v807
    %v809 = vand.u32 %v808, 4294901760
    %810 = vmatmul.mubr.f32.gmra.mxu0 %v809
    %v811 = vpop.f32.mrf.mxu0
    %v812 = vadd.f32 %v738, %v811
    %v813 = vpop.f32.mrf.mxu0
    %814 = vdwg.mxu0
    %815 = vmatprep.subr.mxu0 0.0
    %816 = vmatpush1.msra.mxu0 0.0
    %817 = vmatprep.subr.mxu0 0.0
    %818 = vmatpush1.msra.mxu0 0.0
    %819 = vmatprep.subr.mxu0 0.0
    %820 = vmatpush1.msra.mxu0 0.0
    %821 = vmatprep.subr.mxu0 0.0
    %822 = vmatpush1.msra.mxu0 0.0
    %823 = vmatprep.subr.mxu0 0.0
    %824 = vmatpush1.msra.mxu0 0.0
    %825 = vmatprep.subr.mxu0 0.0
    %826 = vmatpush1.msra.mxu0 0.0
    %827 = vmatprep.subr.mxu0 0.0
    %828 = vmatpush1.msra.mxu0 0.0
    %829 = vmatprep.subr.mxu0 0.0
    %830 = vmatpush1.msra.mxu0 0.0
    %831 = vmatprep.subr.mxu0 0.0
    %832 = vmatpush1.msra.mxu0 0.0
    %833 = vmatprep.subr.mxu0 0.0
    %834 = vmatpush1.msra.mxu0 0.0
    %835 = vmatprep.subr.mxu0 0.0
    %836 = vmatpush1.msra.mxu0 0.0
    %837 = vmatprep.subr.mxu0 0.0
    %838 = vmatpush1.msra.mxu0 0.0
    %839 = vmatprep.subr.mxu0 0.0
    %840 = vmatpush1.msra.mxu0 0.0
    %841 = vmatprep.subr.mxu0 0.0
    %842 = vmatpush1.msra.mxu0 0.0
    %843 = vmatprep.subr.mxu0 0.0
    %844 = vmatpush1.msra.mxu0 0.0
    %845 = vmatprep.subr.mxu0 0.0
    %v846 = vand.u32 %v63, 4294901760
    %v847 = vsub.f32 %v63, %v846
    %v848 = vand.u32 %v847, 4294901760
    %849 = vmatpush1.msra.mxu0 %v848
    %850 = vmatprep.subr.mxu0 0.0
    %851 = vmatpush2.msra.mxu0 0.0
    %852 = vmatprep.subr.mxu0 0.0
    %853 = vmatpush2.msra.mxu0 0.0
    %854 = vmatprep.subr.mxu0 0.0
    %855 = vmatpush2.msra.mxu0 0.0
    %856 = vmatprep.subr.mxu0 0.0
    %857 = vmatpush2.msra.mxu0 0.0
    %858 = vmatprep.subr.mxu0 0.0
    %859 = vmatpush2.msra.mxu0 0.0
    %860 = vmatprep.subr.mxu0 0.0
    %861 = vmatpush2.msra.mxu0 0.0
    %862 = vmatprep.subr.mxu0 0.0
    %863 = vmatpush2.msra.mxu0 0.0
    %864 = vmatprep.subr.mxu0 0.0
    %865 = vmatpush2.msra.mxu0 0.0
    %866 = vmatprep.subr.mxu0 0.0
    %867 = vmatpush2.msra.mxu0 0.0
    %868 = vmatprep.subr.mxu0 0.0
    %869 = vmatpush2.msra.mxu0 0.0
    %870 = vmatprep.subr.mxu0 0.0
    %871 = vmatpush2.msra.mxu0 0.0
    %872 = vmatprep.subr.mxu0 0.0
    %873 = vmatpush2.msra.mxu0 0.0
    %874 = vmatprep.subr.mxu0 0.0
    %875 = vmatpush2.msra.mxu0 0.0
    %876 = vmatprep.subr.mxu0 0.0
    %877 = vmatpush2.msra.mxu0 0.0
    %878 = vmatprep.subr.mxu0 0.0
    %879 = vmatpush2.msra.mxu0 0.0
    %880 = vmatprep.subr.mxu0 0.0
    %881 = vmatpush2.msra.mxu0 0.0
    %882 = vmatprep.mubr.f32.mxu0 0.0
    %v883 = vand.u32 %v513, 4294901760
    %884 = vmatmul.mubr.f32.gmra.mxu0 %v883
    %v885 = vpop.f32.mrf.mxu0
    %v886 = vadd.f32 %v812, %v885
    %v887 = vpop.f32.mrf.mxu0
    %888 = vdwg.mxu0
    %889 = vmatprep.subr.mxu0 0.0
    %890 = vmatpush1.msra.mxu0 0.0
    %891 = vmatprep.subr.mxu0 0.0
    %892 = vmatpush1.msra.mxu0 0.0
    %893 = vmatprep.subr.mxu0 0.0
    %894 = vmatpush1.msra.mxu0 0.0
    %895 = vmatprep.subr.mxu0 0.0
    %896 = vmatpush1.msra.mxu0 0.0
    %897 = vmatprep.subr.mxu0 0.0
    %898 = vmatpush1.msra.mxu0 0.0
    %899 = vmatprep.subr.mxu0 0.0
    %900 = vmatpush1.msra.mxu0 0.0
    %901 = vmatprep.subr.mxu0 0.0
    %902 = vmatpush1.msra.mxu0 0.0
    %903 = vmatprep.subr.mxu0 0.0
    %904 = vmatpush1.msra.mxu0 0.0
    %905 = vmatprep.subr.mxu0 0.0
    %906 = vmatpush1.msra.mxu0 0.0
    %907 = vmatprep.subr.mxu0 0.0
    %908 = vmatpush1.msra.mxu0 0.0
    %909 = vmatprep.subr.mxu0 0.0
    %910 = vmatpush1.msra.mxu0 0.0
    %911 = vmatprep.subr.mxu0 0.0
    %912 = vmatpush1.msra.mxu0 0.0
    %913 = vmatprep.subr.mxu0 0.0
    %914 = vmatpush1.msra.mxu0 0.0
    %915 = vmatprep.subr.mxu0 0.0
    %916 = vmatpush1.msra.mxu0 0.0
    %917 = vmatprep.subr.mxu0 0.0
    %918 = vmatpush1.msra.mxu0 0.0
    %919 = vmatprep.subr.mxu0 0.0
    %v920 = vand.u32 %v63, 4294901760
    %921 = vmatpush1.msra.mxu0 %v920
    %922 = vmatprep.subr.mxu0 0.0
    %923 = vmatpush2.msra.mxu0 0.0
    %924 = vmatprep.subr.mxu0 0.0
    %925 = vmatpush2.msra.mxu0 0.0
    %926 = vmatprep.subr.mxu0 0.0
    %927 = vmatpush2.msra.mxu0 0.0
    %928 = vmatprep.subr.mxu0 0.0
    %929 = vmatpush2.msra.mxu0 0.0
    %930 = vmatprep.subr.mxu0 0.0
    %931 = vmatpush2.msra.mxu0 0.0
    %932 = vmatprep.subr.mxu0 0.0
    %933 = vmatpush2.msra.mxu0 0.0
    %934 = vmatprep.subr.mxu0 0.0
    %935 = vmatpush2.msra.mxu0 0.0
    %936 = vmatprep.subr.mxu0 0.0
    %937 = vmatpush2.msra.mxu0 0.0
    %938 = vmatprep.subr.mxu0 0.0
    %939 = vmatpush2.msra.mxu0 0.0
    %940 = vmatprep.subr.mxu0 0.0
    %941 = vmatpush2.msra.mxu0 0.0
    %942 = vmatprep.subr.mxu0 0.0
    %943 = vmatpush2.msra.mxu0 0.0
    %944 = vmatprep.subr.mxu0 0.0
    %945 = vmatpush2.msra.mxu0 0.0
    %946 = vmatprep.subr.mxu0 0.0
    %947 = vmatpush2.msra.mxu0 0.0
    %948 = vmatprep.subr.mxu0 0.0
    %949 = vmatpush2.msra.mxu0 0.0
    %950 = vmatprep.subr.mxu0 0.0
    %951 = vmatpush2.msra.mxu0 0.0
    %952 = vmatprep.subr.mxu0 0.0
    %953 = vmatpush2.msra.mxu0 0.0
    %954 = vmatprep.mubr.f32.mxu0 0.0
    %v955 = vand.u32 %v513, 4294901760
    %956 = vmatmul.mubr.f32.gmra.mxu0 %v955
    %v957 = vpop.f32.mrf.mxu0
    %v958 = vadd.f32 %v886, %v957
    %v959 = vpop.f32.mrf.mxu0
    %960 = vdwg.mxu0
    %v961 = vadd.f32 %v60, %v510
    %v962 = vadd.f32 %v61, %v958
    %vm963 = vcmask 253952
    %964 = vst.msk [vmem:[#allocation2] sm:$0x1] %vm963, %v961
    %965 = vst.msk [vmem:[#allocation2 + $0x1] sm:$0x1] %vm963, %v962
    // Predicated region
    $region22: #{tpu_custom_call.1} parent=1 // pred_check
      %p966 = pneg %p29
    $region23: #{tpu_custom_call.1} parent=1 // pred_check_branch
      %968 = sbr.rel (%p966) target = $region25
    $region24: #{tpu_custom_call.1} parent=1 // pred_region
      %v969 = vld [vmem:[#allocation2] sm:$0x1]
      %v970 = vld [vmem:[#allocation2 + $0x1] sm:$0x1]
      %v971 = vld [vmem:[%s2] sm:$0x3]
      %973 = vset.pattern.permute.xlu0 0
      %974 = vperm.xlu0 %973, %v971
      %v975 = vpop.permute.xlu0 %974
      %v976 = vlaneseq
      %v977 = vshrl.u32 %v976, 7
      %v978 = vsub.s32 0, %v977
      %v979 = vrot.slane %v975, %v978
      %v980 = vlaneseq
      %v981 = vshrl.u32 %v980, 7
      %v982 = vsub.s32 1, %v981
      %v983 = vrot.slane %v975, %v982
      %v986 = vmul.f32 %v969, %v979
      %v987 = vmul.f32 %v970, %v983
      %v990 = vcombine.low %v986, %v987
      %v992 = vunpack.c.l.s4 1966171168
      %v993 = vunpack.c.0.s8 %v992
      %v994 = vlaneseq
      %v995 = vshrl.u32 %v994, 7
      %v996 = vsub.s32 %v993, %v995
      %v997 = vrot.slane %v990, %v996
      %v999 = vunpack.c.l.s4 1966171168
      %v1000 = vunpack.c.0.s8 %v999
      %v1001 = vlaneseq
      %v1002 = vshrl.u32 %v1001, 7
      %v1003 = vsub.s32 %v1000, %v1002
      %v1004 = vrot.slane %v997, %v1003
      %vm1006 = vcmask 254976
      %1007 = vst.msk [vmem:[#allocation6] sm:$0x3] %vm1006, %v1004
    $region25: #{tpu_custom_call.1} parent=1 // pred_fallthru
      _
    // Predicated region
    $region26: #{tpu_custom_call.1} parent=1 // pred_check
      _
    $region27: #{tpu_custom_call.1} parent=1 // pred_check_branch
      %1009 = sbr.rel (0) target = $region29
    $region28: #{tpu_custom_call.1} parent=1 // pred_region
      %s1011 = ssub.s32 32, 32
      %1012 = vsyncadd [#allocation5], %s1011
      %s1014 = sshll.u32 [#allocation6], 4
      %s1015 = int_to_ptr.vmem [resolvable:$true] %s1014
      %1017 = dma.vmem_to_hbm [thread:$0]  %s1015, 32, %s3, [#allocation5]
    $region29: #{tpu_custom_call.1} parent=1 // pred_fallthru
      _
    // Predicated region
    $region30: #{tpu_custom_call.1} parent=1 // pred_check
      _
    $region31: #{tpu_custom_call.1} parent=1 // pred_check_branch
      %1019 = sbr.rel (0) target = $region33
    $region32: #{tpu_custom_call.1} parent=1 // pred_region
      %1020 = dma.done [#allocation5], 32
    $region33: #{tpu_custom_call.1} parent=1 // pred_fallthru
      _
    %1021 = vsyncpa [#allocation4], 1
    %1022 = vsyncpa [#allocation5], 1

</llo_original>
